<compile_context>
chip_gen: v7x
topology: tpu7x:2x2x1
jax: 0.10.0
libtpu: 0.0.40
codegen_flags: <defaults>
</compile_context>

<pallas_src>
import numpy as np
import jax
import jax.numpy as jnp
from jax.experimental import pallas as pl
from jax.experimental.pallas import tpu as pltpu

try:  # fast C solver if present; pure-NumPy fallback below keeps script self-contained
    from scipy.optimize import linear_sum_assignment as _scipy_lsa
except Exception:  # pragma: no cover
    _scipy_lsa = None

_VMEM_IO_BUDGET = 8 * 1024 * 1024    # per-step single-buffer I/O budget
_VMEM_LIMIT = 32 * 1024 * 1024       # requested scoped VMEM (safe on v5e/v6e/v7x)


# ----------------------------------------------------------------------------
# small tiling helpers (pure Python, trace time)
# ----------------------------------------------------------------------------
def _round_up(x, m):
    return ((x + m - 1) // m) * m


def _largest_divisor_leq(n, cap):
    cap = max(1, min(n, int(cap)))
    for d in range(cap, 0, -1):
        if n % d == 0:
            return d
    return 1


def _pick_col_tile(n_pad, cap=512):
    # largest multiple of 128 that divides n_pad and is <= cap
    nt = min(n_pad, max(128, cap))
    nt = (nt // 128) * 128
    while n_pad % nt:
        nt -= 128
    return nt


# ----------------------------------------------------------------------------
# Kernel 1: pairwise euclidean distance (torch.cdist(pred, target, p=2))
# ----------------------------------------------------------------------------
def _make_cdist_kernel(use_bf16_mxu):
    def kernel(p_ref, t_ref, c_ref):
        p = p_ref[...].astype(jnp.float32)          # (Bt, N,  D)
        t = t_ref[...].astype(jnp.float32)          # (Bt, Nt, D)

        # squared norms on the VPU/XLU (keep the MXU free for the big matmul);
        # elementwise math stays in f32 even when the MXU operands are bf16.
        pn = jnp.sum(p * p, axis=-1, keepdims=True)     # (Bt, N, 1)
        tn = jnp.sum(t * t, axis=-1)[:, None, :]        # (Bt, 1, Nt)

        if use_bf16_mxu:
            pm = p.astype(jnp.bfloat16)
            tm = t.astype(jnp.bfloat16)
        else:
            pm, tm = p, t
        # inner products p @ t^T on the MXU, f32 accumulate (batched dot_general)
        pt = jnp.einsum('bnd,bmd->bnm', pm, tm,
                        preferred_element_type=jnp.float32)   # (Bt, N, Nt)

        d2 = jnp.maximum(pn + tn - 2.0 * pt, 0.0)
        c_ref[...] = jnp.sqrt(d2)
    return kernel


def pairwise_l2(pred, target, use_bf16_mxu=False):
    B, N, D = pred.shape
    n_pad = _round_up(N, 128)                     # lane-dense cost output
    tgt = target if n_pad == N else jnp.pad(target, ((0, 0), (0, n_pad - N), (0, 0)))
    nt = _pick_col_tile(n_pad)
    per_batch_bytes = 4 * (N * D + nt * D + N * nt)
    bt = _largest_divisor_leq(B, _VMEM_IO_BUDGET // max(per_batch_bytes, 1))

    cost = pl.pallas_call(
        _make_cdist_kernel(use_bf16_mxu),
        out_shape=jax.ShapeDtypeStruct((B, N, n_pad), jnp.float32),
        grid=(B // bt, n_pad // nt),
        in_specs=[pl.BlockSpec((bt, N, D), lambda b, j: (b, 0, 0)),
                  pl.BlockSpec((bt, nt, D), lambda b, j: (b, j, 0))],
        out_specs=pl.BlockSpec((bt, N, nt), lambda b, j: (b, 0, j)),
        compiler_params=pltpu.CompilerParams(
            dimension_semantics=("parallel", "parallel"),
            vmem_limit_bytes=_VMEM_LIMIT),
    )(pred, tgt)
    # drop the padded columns before the (host) Hungarian step / D2H transfer
    return cost[:, :, :N]


# ----------------------------------------------------------------------------
# Kernel 2: matched-pair loss -> per-batch partial losses (parallel over batch)
# ----------------------------------------------------------------------------
def _make_matched_loss_kernel(base_loss):
    def kernel(idx_ref, p_ref, t_ref, out_ref):
        idx = idx_ref[...]                          # (Bt, 1, N) int32, lane-dense
        p = p_ref[...].astype(jnp.float32)          # (Bt, N, D)
        t = t_ref[...].astype(jnp.float32)          # (Bt, N, D)
        bt, n, d = p.shape

        # transposed one-hot permutation: perm_t[b, j, i] = (col_ind[b, i] == j)
        rows = jax.lax.broadcasted_iota(jnp.int32, (bt, n, n), 1)
        perm_t = (rows == idx).astype(jnp.float32)  # (Bt, N_j, N_i)
        # gathered[b, i, :] = t[b, col_ind[b, i], :]  (exact one-hot matmul, MXU)
        gathered = jnp.einsum('bji,bjd->bid', perm_t, t,
                              preferred_element_type=jnp.float32)

        diff = p - gathered
        if base_loss == 'mse':
            elem = diff * diff
        else:  # 'l1'
            elem = jnp.abs(diff)
        s = jnp.sum(elem, axis=2, keepdims=True)    # (Bt, N, 1)  lane reduce
        s = jnp.sum(s, axis=1, keepdims=True)       # (Bt, 1, 1)  sublane reduce
        out_ref[...] = s * (1.0 / float(n * d))     # per-batch mean (same N, D per batch)
    return kernel


def matched_loss(pred, target, col_ind, base_loss='mse'):
    B, N, D = pred.shape
    idx = jnp.asarray(col_ind, dtype=jnp.int32).reshape(B, 1, N)  # lane-dense layout
    per_batch_bytes = 4 * (2 * N * D + 2 * N * N + N)
    bt = _largest_divisor_leq(B, _VMEM_IO_BUDGET // max(per_batch_bytes, 1))

    per_batch = pl.pallas_call(
        _make_matched_loss_kernel(base_loss),
        out_shape=jax.ShapeDtypeStruct((B, 1, 1), jnp.float32),
        grid=(B // bt,),
        in_specs=[pl.BlockSpec((bt, 1, N), lambda b: (b, 0, 0)),
                  pl.BlockSpec((bt, N, D), lambda b: (b, 0, 0)),
                  pl.BlockSpec((bt, N, D), lambda b: (b, 0, 0))],
        out_specs=pl.BlockSpec((bt, 1, 1), lambda b: (b, 0, 0)),
        compiler_params=pltpu.CompilerParams(
            dimension_semantics=("parallel",),
            vmem_limit_bytes=_VMEM_LIMIT),
    )(idx, pred, target)
    # mean over batches outside the kernel (no serial accumulator in the grid)
    return jnp.mean(per_batch)


# ----------------------------------------------------------------------------
# Host-side Hungarian algorithm (scipy.optimize.linear_sum_assignment clone)
# ----------------------------------------------------------------------------
def linear_sum_assignment_np(cost):
    """Minimal-cost square assignment (Jonker-Volgenant / Kuhn-Munkres)."""
    cost = np.asarray(cost, dtype=np.float64)
    n = cost.shape[0]
    INF = float('inf')
    u = np.zeros(n + 1)
    v = np.zeros(n + 1)
    p = np.zeros(n + 1, dtype=int)     # p[j]: row assigned to column j (1-based)
    way = np.zeros(n + 1, dtype=int)
    for i in range(1, n + 1):
        p[0] = i
        j0 = 0
        minv = np.full(n + 1, INF)
        used = np.zeros(n + 1, dtype=bool)
        while True:
            used[j0] = True
            i0 = p[j0]
            delta = INF
            j1 = -1
            for j in range(1, n + 1):
                if not used[j]:
                    cur = cost[i0 - 1, j - 1] - u[i0] - v[j]
                    if cur < minv[j]:
                        minv[j] = cur
                        way[j] = j0
                    if minv[j] < delta:
                        delta = minv[j]
                        j1 = j
            for j in range(n + 1):
                if used[j]:
                    u[p[j]] += delta
                    v[j] -= delta
                else:
                    minv[j] -= delta
            j0 = j1
            if p[j0] == 0:
                break
        while True:
            j1 = way[j0]
            p[j0] = p[j1]
            j0 = j1
            if j0 == 0:
                break
    col_ind = np.zeros(n, dtype=np.int64)
    for j in range(1, n + 1):
        col_ind[p[j] - 1] = j - 1
    row_ind = np.arange(n, dtype=np.int64)
    return row_ind, col_ind


def _solve_assignment(cost_b):
    if _scipy_lsa is not None:
        return _scipy_lsa(cost_b)
    return linear_sum_assignment_np(cost_b)


# ----------------------------------------------------------------------------
# Full HungarianLoss forward
# ----------------------------------------------------------------------------
def hungarian_loss(pred, target, base_loss='mse', use_bf16_mxu=False):
    """use_bf16_mxu: bf16 MXU operands for the cost matmul (faster at large N,D;
    near-tie Hungarian matchings may flip, so it is off by default)."""
    B = pred.shape[0]
    cost = pairwise_l2(pred, target, use_bf16_mxu=use_bf16_mxu)   # Pallas kernel (MXU)
    # TODO(synk): the Hungarian matching is a sequential, data-dependent
    # combinatorial algorithm with no clean Pallas equivalent; it runs on the
    # host (scipy if available, else the NumPy JV clone). For large B the
    # per-batch D2H transfer + solve could be overlapped with the next batch's
    # cost computation via jax.pure_callback.
    cost_np = np.asarray(jax.device_get(cost), dtype=np.float64)
    col_inds = np.stack(
        [_solve_assignment(cost_np[b])[1] for b in range(B)], axis=0)
    # row_ind is arange(N) for square matrices, so pred[b][row_ind] == pred[b].
    return matched_loss(pred, target, col_inds, base_loss)        # Pallas kernel


if __name__ == "__main__":
    B, N, D = 2, 8, 32
    key = jax.random.PRNGKey(0)
    k1, k2 = jax.random.split(key)
    pred = jax.random.normal(k1, (B, N, D), dtype=jnp.float32)
    target = jax.random.normal(k2, (B, N, D), dtype=jnp.float32)

    # --- host f64 reference (same math as the PyTorch module) ---
    pred_np = np.asarray(pred, dtype=np.float64)
    target_np = np.asarray(target, dtype=np.float64)
    cost_ref = np.sqrt(
        ((pred_np[:, :, None, :] - target_np[:, None, :, :]) ** 2).sum(-1))
    ref_mse, ref_l1 = [], []
    for b in range(B):
        _, col = _solve_assignment(cost_ref[b])
        ref_mse.append(((pred_np[b] - target_np[b][col]) ** 2).mean())
        ref_l1.append(np.abs(pred_np[b] - target_np[b][col]).mean())
    ref_mse = float(np.mean(ref_mse))
    ref_l1 = float(np.mean(ref_l1))

    # default (f32 MXU) path — exact forward semantics
    loss_mse = jax.block_until_ready(hungarian_loss(pred, target, base_loss='mse'))
    assert abs(float(loss_mse) - ref_mse) < 1e-4, (float(loss_mse), ref_mse)

    loss_l1 = jax.block_until_ready(hungarian_loss(pred, target, base_loss='l1'))
    assert abs(float(loss_l1) - ref_l1) < 1e-4, (float(loss_l1), ref_l1)

    # bf16 MXU operand path (perf option) — sanity check only: near-tie
    # matchings may flip under bf16 cost perturbation, so no tight tolerance.
    loss_bf16 = jax.block_until_ready(
        hungarian_loss(pred, target, base_loss='mse', use_bf16_mxu=True))
    assert np.isfinite(float(loss_bf16)) and float(loss_bf16) >= 0.0, float(loss_bf16)

    print("KERNEL_OK")
</pallas_src>

<mosaic_0001>
module attributes {stable_mosaic.version = 11 : i64} {
  func.func @kernel(%arg0: i32, %arg1: i32, %arg2: memref<2x8x32xf32, #tpu.memory_space<vmem>>, %arg3: memref<2x128x32xf32, #tpu.memory_space<vmem>>, %arg4: memref<2x8x128xf32, #tpu.memory_space<vmem>>) attributes {dimension_semantics = [#tpu.dimension_semantics<parallel>, #tpu.dimension_semantics<parallel>], iteration_bounds = array<i64: 1, 1>, scalar_prefetch = 0 : i64, scratch_operands = 0 : i64, tpu.core_type = #tpu.core_type<tc>, window_params = [{transform_indices = @transform_0, window_bounds = array<i64: 2, 8, 32>}, {transform_indices = @transform_1, window_bounds = array<i64: 2, 128, 32>}, {transform_indices = @transform_2, window_bounds = array<i64: 2, 8, 128>}]} {
    %c0 = arith.constant 0 : index
    %c0_0 = arith.constant 0 : index
    %c0_1 = arith.constant 0 : index
    %0 = vector.load %arg2[%c0, %c0_0, %c0_1] : memref<2x8x32xf32, #tpu.memory_space<vmem>>, vector<2x8x32xf32>
    %c0_2 = arith.constant 0 : index
    %c0_3 = arith.constant 0 : index
    %c0_4 = arith.constant 0 : index
    %1 = vector.load %arg3[%c0_2, %c0_3, %c0_4] : memref<2x128x32xf32, #tpu.memory_space<vmem>>, vector<2x128x32xf32>
    %2 = arith.mulf %0, %0 : vector<2x8x32xf32>
    %cst = arith.constant dense<0.000000e+00> : vector<2x8xf32>
    %3 = vector.multi_reduction <add>, %2, %cst [2] : vector<2x8x32xf32> to vector<2x8xf32>
    %4 = vector.shape_cast %3 : vector<2x8xf32> to vector<2x8x1xf32>
    %5 = arith.mulf %1, %1 : vector<2x128x32xf32>
    %cst_5 = arith.constant dense<0.000000e+00> : vector<2x128xf32>
    %6 = vector.multi_reduction <add>, %5, %cst_5 [2] : vector<2x128x32xf32> to vector<2x128xf32>
    %7 = vector.shape_cast %6 : vector<2x128xf32> to vector<2x1x128xf32>
    "tpu.trace_start"() <{level = 10 : i32, message = "bnd,bmd->bnm"}> : () -> ()
    %cst_6 = arith.constant dense<0.000000e+00> : vector<2x8x128xf32>
    %8 = tpu.matmul %0, %1, %cst_6 {dimension_numbers = #tpu.dot_dimension_numbers<[2], [2], [1], [1], [0, 0, 0, 1, 1, 1], [0], [0]>} : vector<2x8x32xf32>, vector<2x128x32xf32>, vector<2x8x128xf32> -> vector<2x8x128xf32>
    "tpu.trace_stop"() : () -> ()
    %9 = vector.broadcast %4 : vector<2x8x1xf32> to vector<2x8x128xf32>
    %10 = vector.broadcast %7 : vector<2x1x128xf32> to vector<2x8x128xf32>
    %11 = arith.addf %9, %10 : vector<2x8x128xf32>
    %cst_7 = arith.constant 2.000000e+00 : f32
    %12 = vector.broadcast %cst_7 : f32 to vector<2x8x128xf32>
    %13 = arith.mulf %12, %8 : vector<2x8x128xf32>
    %14 = arith.subf %11, %13 : vector<2x8x128xf32>
    %cst_8 = arith.constant 0.000000e+00 : f32
    %15 = vector.broadcast %cst_8 : f32 to vector<2x8x128xf32>
    %16 = arith.maximumf %14, %15 : vector<2x8x128xf32>
    %17 = math.sqrt %16 : vector<2x8x128xf32>
    %c0_9 = arith.constant 0 : index
    %c0_10 = arith.constant 0 : index
    %c0_11 = arith.constant 0 : index
    %18 = vector.load %arg4[%c0_9, %c0_10, %c0_11] : memref<2x8x128xf32, #tpu.memory_space<vmem>>, vector<2x8x128xf32>
    tpu.vector_store %arg4[%c0_9, %c0_10, %c0_11], %17 {strides = array<i32>} : memref<2x8x128xf32, #tpu.memory_space<vmem>>, vector<2x8x128xf32>,
    return
  }
  func.func @transform_0(%arg0: i32, %arg1: i32) -> (i32, i32, i32) {
    %c0_i32 = arith.constant 0 : i32
    %c0_i32_0 = arith.constant 0 : i32
    %c0_i32_1 = arith.constant 0 : i32
    return %arg0, %c0_i32, %c0_i32_0 : i32, i32, i32
  }
  func.func @transform_1(%arg0: i32, %arg1: i32) -> (i32, i32, i32) {
    %c0_i32 = arith.constant 0 : i32
    %c0_i32_0 = arith.constant 0 : i32
    return %arg0, %arg1, %c0_i32 : i32, i32, i32
  }
  func.func @transform_2(%arg0: i32, %arg1: i32) -> (i32, i32, i32) {
    %c0_i32 = arith.constant 0 : i32
    %c0_i32_0 = arith.constant 0 : i32
    return %arg0, %c0_i32, %arg1 : i32, i32, i32
  }
}

</mosaic_0001>

<llo_original>
// kernel: tpu_custom_call.1
$region0: #{tpu_custom_call.1}
  #allocation0 [shape = 'u32[]', space=smem, size = 0x4, offset = 0x4, fixed_abs, tag = 'smem constant byte address 0x4 - core index']
  #allocation1 [shape = 'u32[144,128]{1,0:T(1,128)}', space=vmem, size = 0x12000, scoped, tag = 'internal scratch']
  %s0 = inlined_call_operand.vmem [shape: f32[2,8,32], index: 0, kind: input, shape index: {}]
  %s1 = inlined_call_operand.vmem [shape: f32[2,128,32], index: 1, kind: input, shape index: {}]
  %s2 = inlined_call_operand.hbm [shape: f32[2,8,128], index: 2, kind: output, shape index: {}]
  %s3 = sld [smem:[#allocation0]]
  $region18: #{tpu_custom_call.1} parent=0
    _
  %s5 = ssub.s32 1, %s3
  %s6 = scalar_select 0, %s5, %s3
  $region1: #{tpu_custom_call.1} parent=0
    #allocation2 [shape = 'u8[8192]{0}', space=vmem, size = 0x2000, scoped, tag = 'output window, operand 0, single buffered']
    #allocation3 [shape = 's32[1]{0}', space=sflag, size = 0x4, scoped, tag = 'scoped memory for tpu_custom_call.1']
    %7 = vsyncpa [#allocation3], 0
    // Predicated region
    $region2: #{tpu_custom_call.1} parent=1 // pred_check
      _
    $region3: #{tpu_custom_call.1} parent=1 // pred_check_branch
      %9 = sbr.rel (0) target = $region5
    $region4: #{tpu_custom_call.1} parent=1 // pred_region
      _
    $region5: #{tpu_custom_call.1} parent=1 // pred_fallthru
      _
    // Predicated region
    $region6: #{tpu_custom_call.1} parent=1 // pred_check
      _
    $region7: #{tpu_custom_call.1} parent=1 // pred_check_branch
      %11 = sbr.rel (0) target = $region9
    $region8: #{tpu_custom_call.1} parent=1 // pred_region
      _
    $region9: #{tpu_custom_call.1} parent=1 // pred_fallthru
      _
    %v12 = vld [vmem:[%s0] sm:$0xff]
    %v13 = vld [vmem:[%s0 + $0x8] sm:$0xff]
    %v14 = vld [vmem:[%s1] sm:$0xff]
    %v15 = vld [vmem:[%s1 + $0x8] sm:$0xff]
    %v16 = vld [vmem:[%s1 + $0x10] sm:$0xff]
    %v17 = vld [vmem:[%s1 + $0x18] sm:$0xff]
    %v18 = vld [vmem:[%s1 + $0x20] sm:$0xff]
    %v19 = vld [vmem:[%s1 + $0x28] sm:$0xff]
    %v20 = vld [vmem:[%s1 + $0x30] sm:$0xff]
    %v21 = vld [vmem:[%s1 + $0x38] sm:$0xff]
    %v22 = vld [vmem:[%s1 + $0x40] sm:$0xff]
    %v23 = vld [vmem:[%s1 + $0x48] sm:$0xff]
    %v24 = vld [vmem:[%s1 + $0x50] sm:$0xff]
    %v25 = vld [vmem:[%s1 + $0x58] sm:$0xff]
    %v26 = vld [vmem:[%s1 + $0x60] sm:$0xff]
    %v27 = vld [vmem:[%s1 + $0x68] sm:$0xff]
    %v28 = vld [vmem:[%s1 + $0x70] sm:$0xff]
    %v29 = vld [vmem:[%s1 + $0x78] sm:$0xff]
    %v30 = vld [vmem:[%s1 + $0x80] sm:$0xff]
    %v31 = vld [vmem:[%s1 + $0x88] sm:$0xff]
    %v32 = vld [vmem:[%s1 + $0x90] sm:$0xff]
    %v33 = vld [vmem:[%s1 + $0x98] sm:$0xff]
    %v34 = vld [vmem:[%s1 + $0xa0] sm:$0xff]
    %v35 = vld [vmem:[%s1 + $0xa8] sm:$0xff]
    %v36 = vld [vmem:[%s1 + $0xb0] sm:$0xff]
    %v37 = vld [vmem:[%s1 + $0xb8] sm:$0xff]
    %v38 = vld [vmem:[%s1 + $0xc0] sm:$0xff]
    %v39 = vld [vmem:[%s1 + $0xc8] sm:$0xff]
    %v40 = vld [vmem:[%s1 + $0xd0] sm:$0xff]
    %v41 = vld [vmem:[%s1 + $0xd8] sm:$0xff]
    %v42 = vld [vmem:[%s1 + $0xe0] sm:$0xff]
    %v43 = vld [vmem:[%s1 + $0xe8] sm:$0xff]
    %v44 = vld [vmem:[%s1 + $0xf0] sm:$0xff]
    %v45 = vld [vmem:[%s1 + $0xf8] sm:$0xff]
    %v46 = vmul.f32 %v12, %v12
    %v47 = vmul.f32 %v13, %v13
    %vm48 = vcmask 261120
    %v49 = vsel %vm48, %v46, 0.0
    %50 = vadd.xlane.f32.xlu0 %v49
    %v51 = vpop.xlane.xlu0 %50
    %v52 = vsel %vm48, %v47, 0.0
    %53 = vadd.xlane.f32.xlu0 %v52
    %v54 = vpop.xlane.xlu0 %53
    %v55 = vmul.f32 %v14, %v14
    %v56 = vmul.f32 %v15, %v15
    %v57 = vmul.f32 %v16, %v16
    %v58 = vmul.f32 %v17, %v17
    %v59 = vmul.f32 %v18, %v18
    %v60 = vmul.f32 %v19, %v19
    %v61 = vmul.f32 %v20, %v20
    %v62 = vmul.f32 %v21, %v21
    %v63 = vmul.f32 %v22, %v22
    %v64 = vmul.f32 %v23, %v23
    %v65 = vmul.f32 %v24, %v24
    %v66 = vmul.f32 %v25, %v25
    %v67 = vmul.f32 %v26, %v26
    %v68 = vmul.f32 %v27, %v27
    %v69 = vmul.f32 %v28, %v28
    %v70 = vmul.f32 %v29, %v29
    %v71 = vmul.f32 %v30, %v30
    %v72 = vmul.f32 %v31, %v31
    %v73 = vmul.f32 %v32, %v32
    %v74 = vmul.f32 %v33, %v33
    %v75 = vmul.f32 %v34, %v34
    %v76 = vmul.f32 %v35, %v35
    %v77 = vmul.f32 %v36, %v36
    %v78 = vmul.f32 %v37, %v37
    %v79 = vmul.f32 %v38, %v38
    %v80 = vmul.f32 %v39, %v39
    %v81 = vmul.f32 %v40, %v40
    %v82 = vmul.f32 %v41, %v41
    %v83 = vmul.f32 %v42, %v42
    %v84 = vmul.f32 %v43, %v43
    %v85 = vmul.f32 %v44, %v44
    %v86 = vmul.f32 %v45, %v45
    %v87 = vsel %vm48, %v55, 0.0
    %88 = vadd.xlane.f32.xlu0 %v87
    %v89 = vpop.xlane.xlu0 %88
    %v90 = vsel %vm48, %v56, 0.0
    %91 = vadd.xlane.f32.xlu0 %v90
    %v92 = vpop.xlane.xlu0 %91
    %v93 = vsel %vm48, %v57, 0.0
    %94 = vadd.xlane.f32.xlu0 %v93
    %v95 = vpop.xlane.xlu0 %94
    %v96 = vsel %vm48, %v58, 0.0
    %97 = vadd.xlane.f32.xlu0 %v96
    %v98 = vpop.xlane.xlu0 %97
    %v99 = vsel %vm48, %v59, 0.0
    %100 = vadd.xlane.f32.xlu0 %v99
    %v101 = vpop.xlane.xlu0 %100
    %v102 = vsel %vm48, %v60, 0.0
    %103 = vadd.xlane.f32.xlu0 %v102
    %v104 = vpop.xlane.xlu0 %103
    %v105 = vsel %vm48, %v61, 0.0
    %106 = vadd.xlane.f32.xlu0 %v105
    %v107 = vpop.xlane.xlu0 %106
    %v108 = vsel %vm48, %v62, 0.0
    %109 = vadd.xlane.f32.xlu0 %v108
    %v110 = vpop.xlane.xlu0 %109
    %v111 = vsel %vm48, %v63, 0.0
    %112 = vadd.xlane.f32.xlu0 %v111
    %v113 = vpop.xlane.xlu0 %112
    %v114 = vsel %vm48, %v64, 0.0
    %115 = vadd.xlane.f32.xlu0 %v114
    %v116 = vpop.xlane.xlu0 %115
    %v117 = vsel %vm48, %v65, 0.0
    %118 = vadd.xlane.f32.xlu0 %v117
    %v119 = vpop.xlane.xlu0 %118
    %v120 = vsel %vm48, %v66, 0.0
    %121 = vadd.xlane.f32.xlu0 %v120
    %v122 = vpop.xlane.xlu0 %121
    %v123 = vsel %vm48, %v67, 0.0
    %124 = vadd.xlane.f32.xlu0 %v123
    %v125 = vpop.xlane.xlu0 %124
    %v126 = vsel %vm48, %v68, 0.0
    %127 = vadd.xlane.f32.xlu0 %v126
    %v128 = vpop.xlane.xlu0 %127
    %v129 = vsel %vm48, %v69, 0.0
    %130 = vadd.xlane.f32.xlu0 %v129
    %v131 = vpop.xlane.xlu0 %130
    %v132 = vsel %vm48, %v70, 0.0
    %133 = vadd.xlane.f32.xlu0 %v132
    %v134 = vpop.xlane.xlu0 %133
    %v135 = vsel %vm48, %v71, 0.0
    %136 = vadd.xlane.f32.xlu0 %v135
    %v137 = vpop.xlane.xlu0 %136
    %v138 = vsel %vm48, %v72, 0.0
    %139 = vadd.xlane.f32.xlu0 %v138
    %v140 = vpop.xlane.xlu0 %139
    %v141 = vsel %vm48, %v73, 0.0
    %142 = vadd.xlane.f32.xlu0 %v141
    %v143 = vpop.xlane.xlu0 %142
    %v144 = vsel %vm48, %v74, 0.0
    %145 = vadd.xlane.f32.xlu0 %v144
    %v146 = vpop.xlane.xlu0 %145
    %v147 = vsel %vm48, %v75, 0.0
    %148 = vadd.xlane.f32.xlu0 %v147
    %v149 = vpop.xlane.xlu0 %148
    %v150 = vsel %vm48, %v76, 0.0
    %151 = vadd.xlane.f32.xlu0 %v150
    %v152 = vpop.xlane.xlu0 %151
    %v153 = vsel %vm48, %v77, 0.0
    %154 = vadd.xlane.f32.xlu0 %v153
    %v155 = vpop.xlane.xlu0 %154
    %v156 = vsel %vm48, %v78, 0.0
    %157 = vadd.xlane.f32.xlu0 %v156
    %v158 = vpop.xlane.xlu0 %157
    %v159 = vsel %vm48, %v79, 0.0
    %160 = vadd.xlane.f32.xlu0 %v159
    %v161 = vpop.xlane.xlu0 %160
    %v162 = vsel %vm48, %v80, 0.0
    %163 = vadd.xlane.f32.xlu0 %v162
    %v164 = vpop.xlane.xlu0 %163
    %v165 = vsel %vm48, %v81, 0.0
    %166 = vadd.xlane.f32.xlu0 %v165
    %v167 = vpop.xlane.xlu0 %166
    %v168 = vsel %vm48, %v82, 0.0
    %169 = vadd.xlane.f32.xlu0 %v168
    %v170 = vpop.xlane.xlu0 %169
    %v171 = vsel %vm48, %v83, 0.0
    %172 = vadd.xlane.f32.xlu0 %v171
    %v173 = vpop.xlane.xlu0 %172
    %v174 = vsel %vm48, %v84, 0.0
    %175 = vadd.xlane.f32.xlu0 %v174
    %v176 = vpop.xlane.xlu0 %175
    %v177 = vsel %vm48, %v85, 0.0
    %178 = vadd.xlane.f32.xlu0 %v177
    %v179 = vpop.xlane.xlu0 %178
    %v180 = vsel %vm48, %v86, 0.0
    %181 = vadd.xlane.f32.xlu0 %v180
    %v182 = vpop.xlane.xlu0 %181
    %v184 = vsel %vm48, %v12, 0
    %v187 = vsel %vm48, %v14, 0
    %v190 = vsel %vm48, %v15, 0
    %v193 = vsel %vm48, %v16, 0
    %v196 = vsel %vm48, %v17, 0
    %v199 = vsel %vm48, %v18, 0
    %v202 = vsel %vm48, %v19, 0
    %v205 = vsel %vm48, %v20, 0
    %v208 = vsel %vm48, %v21, 0
    %v211 = vsel %vm48, %v22, 0
    %v214 = vsel %vm48, %v23, 0
    %v217 = vsel %vm48, %v24, 0
    %v220 = vsel %vm48, %v25, 0
    %v223 = vsel %vm48, %v26, 0
    %v226 = vsel %vm48, %v27, 0
    %v229 = vsel %vm48, %v28, 0
    %v232 = vsel %vm48, %v29, 0
    %234 = vmatprep.subr.mxu0 0.0
    %235 = vmatpush1.xpose.msra.mxu0 %v187
    %236 = vmatprep.subr.mxu0 0.0
    %237 = vmatpush1.xpose.msra.mxu0 %v190
    %238 = vmatprep.subr.mxu0 0.0
    %239 = vmatpush1.xpose.msra.mxu0 %v193
    %240 = vmatprep.subr.mxu0 0.0
    %241 = vmatpush1.xpose.msra.mxu0 %v196
    %242 = vmatprep.subr.mxu0 0.0
    %243 = vmatpush1.xpose.msra.mxu0 %v199
    %244 = vmatprep.subr.mxu0 0.0
    %245 = vmatpush1.xpose.msra.mxu0 %v202
    %246 = vmatprep.subr.mxu0 0.0
    %247 = vmatpush1.xpose.msra.mxu0 %v205
    %248 = vmatprep.subr.mxu0 0.0
    %249 = vmatpush1.xpose.msra.mxu0 %v208
    %250 = vmatprep.subr.mxu0 0.0
    %251 = vmatpush1.xpose.msra.mxu0 %v211
    %252 = vmatprep.subr.mxu0 0.0
    %253 = vmatpush1.xpose.msra.mxu0 %v214
    %254 = vmatprep.subr.mxu0 0.0
    %255 = vmatpush1.xpose.msra.mxu0 %v217
    %256 = vmatprep.subr.mxu0 0.0
    %257 = vmatpush1.xpose.msra.mxu0 %v220
    %258 = vmatprep.subr.mxu0 0.0
    %259 = vmatpush1.xpose.msra.mxu0 %v223
    %260 = vmatprep.subr.mxu0 0.0
    %261 = vmatpush1.xpose.msra.mxu0 %v226
    %262 = vmatprep.subr.mxu0 0.0
    %263 = vmatpush1.xpose.msra.mxu0 %v229
    %264 = vmatprep.subr.mxu0 0.0
    %265 = vmatpush1.xpose.msra.mxu0 %v232
    %266 = vmatprep.subr.mxu0 0.0
    %267 = vmatpush1.xpose.msra.mxu0 0.0
    %268 = vmatprep.subr.mxu0 0.0
    %269 = vmatpush1.xpose.msra.mxu0 0.0
    %270 = vmatprep.subr.mxu0 0.0
    %271 = vmatpush1.xpose.msra.mxu0 0.0
    %272 = vmatprep.subr.mxu0 0.0
    %273 = vmatpush1.xpose.msra.mxu0 0.0
    %274 = vmatprep.subr.mxu0 0.0
    %275 = vmatpush1.xpose.msra.mxu0 0.0
    %276 = vmatprep.subr.mxu0 0.0
    %277 = vmatpush1.xpose.msra.mxu0 0.0
    %278 = vmatprep.subr.mxu0 0.0
    %279 = vmatpush1.xpose.msra.mxu0 0.0
    %280 = vmatprep.subr.mxu0 0.0
    %281 = vmatpush1.xpose.msra.mxu0 0.0
    %282 = vmatprep.subr.mxu0 0.0
    %283 = vmatpush1.xpose.msra.mxu0 0.0
    %284 = vmatprep.subr.mxu0 0.0
    %285 = vmatpush1.xpose.msra.mxu0 0.0
    %286 = vmatprep.subr.mxu0 0.0
    %287 = vmatpush1.xpose.msra.mxu0 0.0
    %288 = vmatprep.subr.mxu0 0.0
    %289 = vmatpush1.xpose.msra.mxu0 0.0
    %290 = vmatprep.subr.mxu0 0.0
    %291 = vmatpush1.xpose.msra.mxu0 0.0
    %292 = vmatprep.subr.mxu0 0.0
    %293 = vmatpush1.xpose.msra.mxu0 0.0
    %294 = vmatprep.subr.mxu0 0.0
    %295 = vmatpush1.xpose.msra.mxu0 0.0
    %296 = vmatprep.subr.mxu0 0.0
    %297 = vmatpush1.xpose.msra.mxu0 0.0
    %298 = vmatprep.mubr.f32.mxu0 0.0
    %299 = vmatmul.mubr.f32.gmra.mrb[0].mxu0 %v184
    %v300 = vpop.f32.mrb[0].mxu0
    %v301 = vadd.f32 0.0, %v300
    %v302 = vpop.f32.mrb[0].mxu0
    %303 = vdwg.mxu0
    %v305 = vsel %vm48, %v13, 0
    %v308 = vsel %vm48, %v30, 0
    %v311 = vsel %vm48, %v31, 0
    %v314 = vsel %vm48, %v32, 0
    %v317 = vsel %vm48, %v33, 0
    %v320 = vsel %vm48, %v34, 0
    %v323 = vsel %vm48, %v35, 0
    %v326 = vsel %vm48, %v36, 0
    %v329 = vsel %vm48, %v37, 0
    %v332 = vsel %vm48, %v38, 0
    %v335 = vsel %vm48, %v39, 0
    %v338 = vsel %vm48, %v40, 0
    %v341 = vsel %vm48, %v41, 0
    %v344 = vsel %vm48, %v42, 0
    %v347 = vsel %vm48, %v43, 0
    %v350 = vsel %vm48, %v44, 0
    %v353 = vsel %vm48, %v45, 0
    %355 = vmatprep.subr.mxu0 0.0
    %356 = vmatpush1.xpose.msra.mxu0 %v308
    %357 = vmatprep.subr.mxu0 0.0
    %358 = vmatpush1.xpose.msra.mxu0 %v311
    %359 = vmatprep.subr.mxu0 0.0
    %360 = vmatpush1.xpose.msra.mxu0 %v314
    %361 = vmatprep.subr.mxu0 0.0
    %362 = vmatpush1.xpose.msra.mxu0 %v317
    %363 = vmatprep.subr.mxu0 0.0
    %364 = vmatpush1.xpose.msra.mxu0 %v320
    %365 = vmatprep.subr.mxu0 0.0
    %366 = vmatpush1.xpose.msra.mxu0 %v323
    %367 = vmatprep.subr.mxu0 0.0
    %368 = vmatpush1.xpose.msra.mxu0 %v326
    %369 = vmatprep.subr.mxu0 0.0
    %370 = vmatpush1.xpose.msra.mxu0 %v329
    %371 = vmatprep.subr.mxu0 0.0
    %372 = vmatpush1.xpose.msra.mxu0 %v332
    %373 = vmatprep.subr.mxu0 0.0
    %374 = vmatpush1.xpose.msra.mxu0 %v335
    %375 = vmatprep.subr.mxu0 0.0
    %376 = vmatpush1.xpose.msra.mxu0 %v338
    %377 = vmatprep.subr.mxu0 0.0
    %378 = vmatpush1.xpose.msra.mxu0 %v341
    %379 = vmatprep.subr.mxu0 0.0
    %380 = vmatpush1.xpose.msra.mxu0 %v344
    %381 = vmatprep.subr.mxu0 0.0
    %382 = vmatpush1.xpose.msra.mxu0 %v347
    %383 = vmatprep.subr.mxu0 0.0
    %384 = vmatpush1.xpose.msra.mxu0 %v350
    %385 = vmatprep.subr.mxu0 0.0
    %386 = vmatpush1.xpose.msra.mxu0 %v353
    %387 = vmatprep.subr.mxu0 0.0
    %388 = vmatpush1.xpose.msra.mxu0 0.0
    %389 = vmatprep.subr.mxu0 0.0
    %390 = vmatpush1.xpose.msra.mxu0 0.0
    %391 = vmatprep.subr.mxu0 0.0
    %392 = vmatpush1.xpose.msra.mxu0 0.0
    %393 = vmatprep.subr.mxu0 0.0
    %394 = vmatpush1.xpose.msra.mxu0 0.0
    %395 = vmatprep.subr.mxu0 0.0
    %396 = vmatpush1.xpose.msra.mxu0 0.0
    %397 = vmatprep.subr.mxu0 0.0
    %398 = vmatpush1.xpose.msra.mxu0 0.0
    %399 = vmatprep.subr.mxu0 0.0
    %400 = vmatpush1.xpose.msra.mxu0 0.0
    %401 = vmatprep.subr.mxu0 0.0
    %402 = vmatpush1.xpose.msra.mxu0 0.0
    %403 = vmatprep.subr.mxu0 0.0
    %404 = vmatpush1.xpose.msra.mxu0 0.0
    %405 = vmatprep.subr.mxu0 0.0
    %406 = vmatpush1.xpose.msra.mxu0 0.0
    %407 = vmatprep.subr.mxu0 0.0
    %408 = vmatpush1.xpose.msra.mxu0 0.0
    %409 = vmatprep.subr.mxu0 0.0
    %410 = vmatpush1.xpose.msra.mxu0 0.0
    %411 = vmatprep.subr.mxu0 0.0
    %412 = vmatpush1.xpose.msra.mxu0 0.0
    %413 = vmatprep.subr.mxu0 0.0
    %414 = vmatpush1.xpose.msra.mxu0 0.0
    %415 = vmatprep.subr.mxu0 0.0
    %416 = vmatpush1.xpose.msra.mxu0 0.0
    %417 = vmatprep.subr.mxu0 0.0
    %418 = vmatpush1.xpose.msra.mxu0 0.0
    %419 = vmatprep.mubr.f32.mxu0 0.0
    %420 = vmatmul.mubr.f32.gmra.mrb[0].mxu0 %v305
    %v421 = vpop.f32.mrb[0].mxu0
    %v422 = vadd.f32 0.0, %v421
    %v423 = vpop.f32.mrb[0].mxu0
    %424 = vdwg.mxu0
    %v457 = vlaneseq
    %v458 = vand.u32 %v457, 127
    %v459 = vlaneseq
    %v460 = vshrl.u32 %v459, 7
    %v461 = vsub.s32 %v458, %v460
    %v462 = vrot.slane %v89, %v461
    %v463 = vadd.s32 %v458, 4294967288
    %v464 = vlaneseq
    %v465 = vshrl.u32 %v464, 7
    %v466 = vsub.s32 %v463, %v465
    %v467 = vrot.slane %v92, %v466
    %vm468 = vcmask 130112
    %v469 = vsel %vm468, %v467, %v462
    %v470 = vadd.s32 %v458, 4294967280
    %v471 = vlaneseq
    %v472 = vshrl.u32 %v471, 7
    %v473 = vsub.s32 %v470, %v472
    %v474 = vrot.slane %v95, %v473
    %vm475 = vcmask 195712
    %v476 = vsel %vm475, %v474, %v469
    %v477 = vadd.s32 %v458, 4294967272
    %v478 = vlaneseq
    %v479 = vshrl.u32 %v478, 7
    %v480 = vsub.s32 %v477, %v479
    %v481 = vrot.slane %v98, %v480
    %vm482 = vcmask 261312
    %v483 = vsel %vm482, %v481, %v476
    %v484 = vadd.s32 %v458, 4294967264
    %v485 = vlaneseq
    %v486 = vshrl.u32 %v485, 7
    %v487 = vsub.s32 %v484, %v486
    %v488 = vrot.slane %v101, %v487
    %vm489 = vcmask 326912
    %v490 = vsel %vm489, %v488, %v483
    %v491 = vadd.s32 %v458, 4294967256
    %v492 = vlaneseq
    %v493 = vshrl.u32 %v492, 7
    %v494 = vsub.s32 %v491, %v493
    %v495 = vrot.slane %v104, %v494
    %vm496 = vcmask 392512
    %v497 = vsel %vm496, %v495, %v490
    %v498 = vadd.s32 %v458, 4294967248
    %v499 = vlaneseq
    %v500 = vshrl.u32 %v499, 7
    %v501 = vsub.s32 %v498, %v500
    %v502 = vrot.slane %v107, %v501
    %vm503 = vcmask 458112
    %v504 = vsel %vm503, %v502, %v497
    %v505 = vadd.s32 %v458, 4294967240
    %v506 = vlaneseq
    %v507 = vshrl.u32 %v506, 7
    %v508 = vsub.s32 %v505, %v507
    %v509 = vrot.slane %v110, %v508
    %vm510 = vcmask 523712
    %v511 = vsel %vm510, %v509, %v504
    %v512 = vadd.s32 %v458, 4294967232
    %v513 = vlaneseq
    %v514 = vshrl.u32 %v513, 7
    %v515 = vsub.s32 %v512, %v514
    %v516 = vrot.slane %v113, %v515
    %vm517 = vcmask 589312
    %v518 = vsel %vm517, %v516, %v511
    %v519 = vadd.s32 %v458, 4294967224
    %v520 = vlaneseq
    %v521 = vshrl.u32 %v520, 7
    %v522 = vsub.s32 %v519, %v521
    %v523 = vrot.slane %v116, %v522
    %vm524 = vcmask 654912
    %v525 = vsel %vm524, %v523, %v518
    %v526 = vadd.s32 %v458, 4294967216
    %v527 = vlaneseq
    %v528 = vshrl.u32 %v527, 7
    %v529 = vsub.s32 %v526, %v528
    %v530 = vrot.slane %v119, %v529
    %vm531 = vcmask 720512
    %v532 = vsel %vm531, %v530, %v525
    %v533 = vadd.s32 %v458, 4294967208
    %v534 = vlaneseq
    %v535 = vshrl.u32 %v534, 7
    %v536 = vsub.s32 %v533, %v535
    %v537 = vrot.slane %v122, %v536
    %vm538 = vcmask 786112
    %v539 = vsel %vm538, %v537, %v532
    %v540 = vadd.s32 %v458, 4294967200
    %v541 = vlaneseq
    %v542 = vshrl.u32 %v541, 7
    %v543 = vsub.s32 %v540, %v542
    %v544 = vrot.slane %v125, %v543
    %vm545 = vcmask 851712
    %v546 = vsel %vm545, %v544, %v539
    %v547 = vadd.s32 %v458, 4294967192
    %v548 = vlaneseq
    %v549 = vshrl.u32 %v548, 7
    %v550 = vsub.s32 %v547, %v549
    %v551 = vrot.slane %v128, %v550
    %vm552 = vcmask 917312
    %v553 = vsel %vm552, %v551, %v546
    %v554 = vadd.s32 %v458, 4294967184
    %v555 = vlaneseq
    %v556 = vshrl.u32 %v555, 7
    %v557 = vsub.s32 %v554, %v556
    %v558 = vrot.slane %v131, %v557
    %vm559 = vcmask 982912
    %v560 = vsel %vm559, %v558, %v553
    %v561 = vadd.s32 %v458, 4294967176
    %v562 = vlaneseq
    %v563 = vshrl.u32 %v562, 7
    %v564 = vsub.s32 %v561, %v563
    %v565 = vrot.slane %v134, %v564
    %vm566 = vcmask 1048512
    %v567 = vsel %vm566, %v565, %v560
    %v568 = vlaneseq
    %v569 = vshrl.u32 %v568, 7
    %v570 = vsub.s32 %v458, %v569
    %v571 = vrot.slane %v137, %v570
    %v572 = vlaneseq
    %v573 = vshrl.u32 %v572, 7
    %v574 = vsub.s32 %v463, %v573
    %v575 = vrot.slane %v140, %v574
    %v576 = vsel %vm468, %v575, %v571
    %v577 = vlaneseq
    %v578 = vshrl.u32 %v577, 7
    %v579 = vsub.s32 %v470, %v578
    %v580 = vrot.slane %v143, %v579
    %v581 = vsel %vm475, %v580, %v576
    %v582 = vlaneseq
    %v583 = vshrl.u32 %v582, 7
    %v584 = vsub.s32 %v477, %v583
    %v585 = vrot.slane %v146, %v584
    %v586 = vsel %vm482, %v585, %v581
    %v587 = vlaneseq
    %v588 = vshrl.u32 %v587, 7
    %v589 = vsub.s32 %v484, %v588
    %v590 = vrot.slane %v149, %v589
    %v591 = vsel %vm489, %v590, %v586
    %v592 = vlaneseq
    %v593 = vshrl.u32 %v592, 7
    %v594 = vsub.s32 %v491, %v593
    %v595 = vrot.slane %v152, %v594
    %v596 = vsel %vm496, %v595, %v591
    %v597 = vlaneseq
    %v598 = vshrl.u32 %v597, 7
    %v599 = vsub.s32 %v498, %v598
    %v600 = vrot.slane %v155, %v599
    %v601 = vsel %vm503, %v600, %v596
    %v602 = vlaneseq
    %v603 = vshrl.u32 %v602, 7
    %v604 = vsub.s32 %v505, %v603
    %v605 = vrot.slane %v158, %v604
    %v606 = vsel %vm510, %v605, %v601
    %v607 = vlaneseq
    %v608 = vshrl.u32 %v607, 7
    %v609 = vsub.s32 %v512, %v608
    %v610 = vrot.slane %v161, %v609
    %v611 = vsel %vm517, %v610, %v606
    %v612 = vlaneseq
    %v613 = vshrl.u32 %v612, 7
    %v614 = vsub.s32 %v519, %v613
    %v615 = vrot.slane %v164, %v614
    %v616 = vsel %vm524, %v615, %v611
    %v617 = vlaneseq
    %v618 = vshrl.u32 %v617, 7
    %v619 = vsub.s32 %v526, %v618
    %v620 = vrot.slane %v167, %v619
    %v621 = vsel %vm531, %v620, %v616
    %v622 = vlaneseq
    %v623 = vshrl.u32 %v622, 7
    %v624 = vsub.s32 %v533, %v623
    %v625 = vrot.slane %v170, %v624
    %v626 = vsel %vm538, %v625, %v621
    %v627 = vlaneseq
    %v628 = vshrl.u32 %v627, 7
    %v629 = vsub.s32 %v540, %v628
    %v630 = vrot.slane %v173, %v629
    %v631 = vsel %vm545, %v630, %v626
    %v632 = vlaneseq
    %v633 = vshrl.u32 %v632, 7
    %v634 = vsub.s32 %v547, %v633
    %v635 = vrot.slane %v176, %v634
    %v636 = vsel %vm552, %v635, %v631
    %v637 = vlaneseq
    %v638 = vshrl.u32 %v637, 7
    %v639 = vsub.s32 %v554, %v638
    %v640 = vrot.slane %v179, %v639
    %v641 = vsel %vm559, %v640, %v636
    %v642 = vlaneseq
    %v643 = vshrl.u32 %v642, 7
    %v644 = vsub.s32 %v561, %v643
    %v645 = vrot.slane %v182, %v644
    %v646 = vsel %vm566, %v645, %v641
    %vm647 = vcmask 1042434
    %v648 = vsel %vm647, %v567, %v567
    %vm649 = vcmask 1043459
    %v650 = vsel %vm649, %v567, %v648
    %vm651 = vcmask 1044484
    %v652 = vsel %vm651, %v567, %v650
    %vm653 = vcmask 1045509
    %v654 = vsel %vm653, %v567, %v652
    %vm655 = vcmask 1046534
    %v656 = vsel %vm655, %v567, %v654
    %vm657 = vcmask 1047559
    %v658 = vsel %vm657, %v567, %v656
    %v659 = vsel %vm647, %v646, %v646
    %v660 = vsel %vm649, %v646, %v659
    %v661 = vsel %vm651, %v646, %v660
    %v662 = vsel %vm653, %v646, %v661
    %v663 = vsel %vm655, %v646, %v662
    %v664 = vsel %vm657, %v646, %v663
    %v667 = vadd.f32 %v51, %v658
    %v668 = vadd.f32 %v54, %v664
    %v669 = vmul.f32 %v301, 2.0
    %v670 = vmul.f32 %v422, 2.0
    %v671 = vsub.f32 %v667, %v669
    %v672 = vsub.f32 %v668, %v670
    %v673 = vmax.f32 %v671, 0.0
    %v674 = vmax.f32 %v672, 0.0
    %v675 = vrsqrt.pop %v673
    %v676 = vmul.f32 %v673, %v675
    %vm677 = vcmp.eq.f32.partialorder %v673, inf
    %v678 = vsel %vm677, %v673, %v676
    %vm679 = vcmp.eq.f32.partialorder %v673, 0.0
    %v680 = vand.u32 %v673, 2147483648
    %v681 = vsel %vm679, %v680, %v678
    %v682 = vrsqrt.pop %v674
    %v683 = vmul.f32 %v674, %v682
    %vm684 = vcmp.eq.f32.partialorder %v674, inf
    %v685 = vsel %vm684, %v674, %v683
    %vm686 = vcmp.eq.f32.partialorder %v674, 0.0
    %v687 = vand.u32 %v674, 2147483648
    %v688 = vsel %vm686, %v687, %v685
    %689 = vst [vmem:[#allocation2] sm:$0xff] %v681
    %690 = vst [vmem:[#allocation2 + $0x8] sm:$0xff] %v688
    // Predicated region
    $region10: #{tpu_custom_call.1} parent=1 // pred_check
      _
    $region11: #{tpu_custom_call.1} parent=1 // pred_check_branch
      %692 = sbr.rel (0) target = $region13
    $region12: #{tpu_custom_call.1} parent=1 // pred_region
      %s694 = ssub.s32 256, 256
      %695 = vsyncadd [#allocation3], %s694
      %s696 = sshll.u32 [#allocation2], 4
      %s697 = int_to_ptr.vmem [resolvable:$true] %s696
      %702 = dma.vmem_to_hbm [thread:$0]  %s697, 256, %s2, [#allocation3], 128, 128, 8
    $region13: #{tpu_custom_call.1} parent=1 // pred_fallthru
      _
    // Predicated region
    $region14: #{tpu_custom_call.1} parent=1 // pred_check
      _
    $region15: #{tpu_custom_call.1} parent=1 // pred_check_branch
      %704 = sbr.rel (0) target = $region17
    $region16: #{tpu_custom_call.1} parent=1 // pred_region
      %705 = dma.done [#allocation3], 256
    $region17: #{tpu_custom_call.1} parent=1 // pred_fallthru
      _
    %706 = vsyncpa [#allocation3], 1

</llo_original>
